<compile_context>
chip_gen: v7x
topology: tpu7x:2x2x1
jax: 0.10.0
libtpu: 0.0.40
codegen_flags: <defaults>
</compile_context>

<pallas_src>
import functools

import jax
import jax.numpy as jnp
from jax.experimental import pallas as pl
from jax.experimental.pallas import tpu as pltpu


def _zca_eval_kernel(x_ref, sub_ref, bias_ref, o_ref, *, groups, length, batch,
                     unroll_threshold=8):
    # x_ref    : (bn, C, thw)  tile of x viewed as (N, C, H*W)
    # sub_ref  : (G, L, L)     weight-scaled running subspaces (all groups)
    # bias_ref : (C, 1)        fused bias = bias - weight * (subspace @ mean)
    # o_ref    : (bn, C, thw)
    L = length

    def one_group(b, g, lo):
        # Ref-sliced load: keep each group's (L, thw) tile adjacent to its
        # matmul instead of materializing the whole (C, thw) block in vregs.
        yg = jnp.dot(sub_ref[g], x_ref[b, pl.ds(lo, L), :],
                     preferred_element_type=jnp.float32)            # MXU (L, thw)
        o_ref[b, pl.ds(lo, L), :] = (
            yg + bias_ref[pl.ds(lo, L), :]).astype(o_ref.dtype)

    for b in range(batch):                        # bn is a small static int
        if groups <= unroll_threshold:
            for g in range(groups):               # static unroll for small G
                one_group(b, g, g * L)
        else:
            # Large G: compact steady-state loop bounds live ranges.
            def body(g, carry):
                one_group(b, g, pl.multiple_of(g * L, L))
                return carry
            jax.lax.fori_loop(0, groups, body, 0, unroll=2)


def zca_norm_eval(x, running_subspace, running_mean, weight, bias, *, groups,
                  max_thw=32768, vmem_budget_bytes=None, vmem_limit_bytes=None):
    """Inference forward of ZCANormPIunstable.

    x                : (N, C, H, W)
    running_subspace : (G, L, L) with L = C // G
    running_mean     : (C, 1)
    weight, bias     : (C, 1)
    """
    N, C, H, W = x.shape
    G = groups
    assert C % G == 0
    L = C // G
    HW = H * W

    itemsize = jnp.dtype(x.dtype).itemsize
    # Per-group sublane slices must stay vreg-aligned for packed dtypes:
    # f32 -> 8 rows/vreg, bf16 -> 16, int8 -> 32.
    rows_per_vreg = max(8, 32 // max(itemsize, 1))
    assert L % rows_per_vreg == 0, (
        f"group length {L} must be a multiple of {rows_per_vreg} for dtype {x.dtype}")

    # Fold the affine weight into the subspaces and the running-mean subtract
    # into the bias (tiny (G,L,L)@(L,1) work, done once in plain JAX):
    #   w*(S@(x-m)) + b  ==  (w*S)@x + (b - w*(S@m))
    w = weight.reshape(C, 1).astype(jnp.float32)
    b = bias.reshape(C, 1).astype(jnp.float32)
    sub = running_subspace.astype(jnp.float32)                       # (G, L, L)
    sub_w = sub * w.reshape(G, L, 1)                                 # scale rows
    sub_mean = jnp.einsum(
        'gij,gjk->gik', sub, running_mean.reshape(G, L, 1).astype(jnp.float32))
    bias_fused = b - w * sub_mean.reshape(C, 1)                      # (C, 1)

    # Free view: NCHW is already contiguous as (N, C, H*W) -- no transpose.
    x3d = x.reshape(N, C, HW)

    # ---- VMEM-aware tile sizing (memory-bound op: tile size is the lever) ----
    try:
        vmem_cap = pltpu.get_tpu_info().vmem_capacity_bytes
    except Exception:  # pragma: no cover - conservative fallback
        vmem_cap = 64 * 1024 * 1024
    if vmem_limit_bytes is None:
        # ~96 MiB on 128 MiB parts (v5e/v6e), ~48 MiB on 64 MiB-per-TC v7x.
        vmem_limit_bytes = min(int(vmem_cap * 3 // 4), 96 * 1024 * 1024)
    if vmem_budget_bytes is None:
        # ~56 MiB on v5e/v6e, ~28 MiB on v7x.
        vmem_budget_bytes = min(int(vmem_cap * 0.45), 56 * 1024 * 1024)
    # Double-buffered parameter tiles (sub_w + bias, f32) count against budget.
    param_bytes = 2 * 4 * (G * L * L + C)
    tile_budget = max(vmem_budget_bytes - param_bytes, 2 * 1024 * 1024)
    # Double-buffered input + output bytes per lane column (per image).
    per_lane = 4 * C * itemsize

    if HW >= 128:
        bn = 1
        cap = max(128, (tile_budget // per_lane) // 128 * 128)
        cap = min(cap, max_thw)
        thw = HW if HW <= cap else cap
        # v7x has 2 TensorCores: make sure there are >= 2 grid steps along a
        # 'parallel' axis when a single image fits in one lane tile.
        if N == 1 and thw >= HW and HW >= 256:
            thw = max(128, pl.cdiv(pl.cdiv(HW, 2), 128) * 128)
    else:
        # Small feature map (HW < 128): batch several images per block to
        # amortize the ~0.35us per-grid-step overhead.  Stores remain < 128
        # lanes wide; padding HW to 128 would fix that but costs a reshape.
        thw = HW
        per_img = max(per_lane * HW, 1)
        bn = int(min(N, max(1, tile_budget // per_img)))

    grid = (pl.cdiv(N, bn), pl.cdiv(HW, thw))

    cost = pl.CostEstimate(
        flops=2 * C * L * N * HW,
        transcendentals=0,
        bytes_accessed=2 * C * N * HW * itemsize + 4 * (G * L * L + 3 * C))

    kernel = functools.partial(_zca_eval_kernel, groups=G, length=L, batch=bn)
    out3d = pl.pallas_call(
        kernel,
        out_shape=jax.ShapeDtypeStruct((N, C, HW), x.dtype),
        grid_spec=pltpu.PrefetchScalarGridSpec(
            num_scalar_prefetch=0,
            grid=grid,
            in_specs=[
                pl.BlockSpec((bn, C, thw), lambda n, m: (n, 0, m)),  # x tile
                pl.BlockSpec((G, L, L), lambda n, m: (0, 0, 0)),     # subspaces
                pl.BlockSpec((C, 1), lambda n, m: (0, 0)),           # fused bias
            ],
            out_specs=pl.BlockSpec((bn, C, thw), lambda n, m: (n, 0, m)),
        ),
        compiler_params=pltpu.CompilerParams(
            dimension_semantics=("parallel", "parallel"),
            vmem_limit_bytes=int(vmem_limit_bytes)),
        cost_estimate=cost,
    )(x3d, sub_w, bias_fused)

    return out3d.reshape(N, C, H, W)


def zca_norm_eval_reference(x, running_subspace, running_mean, weight, bias, *, groups):
    """Pure-JAX reference mirroring the PyTorch eval branch (no folding)."""
    N, C, H, W = x.shape
    G = groups
    L = C // G
    M = N * H * W
    x2 = jnp.transpose(x, (1, 0, 2, 3)).reshape(C, M)
    x2 = x2 - running_mean
    parts = [running_subspace[i] @ x2[i * L:(i + 1) * L] for i in range(G)]
    x2 = jnp.concatenate(parts, axis=0)
    x2 = x2 * weight + bias
    return jnp.transpose(x2.reshape(C, N, H, W), (1, 0, 2, 3))


if __name__ == "__main__":
    key = jax.random.PRNGKey(0)
    k_x, k_w, k_b, k_m, k_s = jax.random.split(key, 5)

    # Small shapes consistent with a 4D conv feature map.
    N, C, H, W = 2, 16, 16, 16
    G = 2
    L = C // G

    x = jax.random.normal(k_x, (N, C, H, W), dtype=jnp.float32)

    # Parameters: __init__ gives weight (C,1) ~ uniform, bias/running_mean = 0,
    # running_subspace_i = eye(L).  Small deterministic perturbations are added
    # so the kernel is exercised non-trivially (synthetic, not a checkpoint).
    weight = jax.random.uniform(k_w, (C, 1), dtype=jnp.float32)
    bias = 0.1 * jax.random.normal(k_b, (C, 1), dtype=jnp.float32)
    running_mean = 0.1 * jax.random.normal(k_m, (C, 1), dtype=jnp.float32)
    pert = 0.05 * jax.random.normal(k_s, (G, L, L), dtype=jnp.float32)
    pert = 0.5 * (pert + jnp.transpose(pert, (0, 2, 1)))   # symmetric, like a real ZCA subspace
    running_subspace = jnp.eye(L, dtype=jnp.float32)[None, :, :] + pert

    run = jax.jit(functools.partial(zca_norm_eval, groups=G))
    out = run(x, running_subspace, running_mean, weight, bias)
    out = jax.block_until_ready(out)

    ref = zca_norm_eval_reference(x, running_subspace, running_mean, weight, bias, groups=G)
    assert out.shape == (N, C, H, W)
    assert jnp.allclose(out, ref, rtol=1e-5, atol=1e-5), "Pallas kernel mismatch vs reference"

    print("KERNEL_OK")
</pallas_src>

<mosaic_0001>
module attributes {stable_mosaic.version = 11 : i64} {
  func.func @_zca_eval_kernel(%arg0: i32, %arg1: i32, %arg2: memref<1x16x256xf32, #tpu.memory_space<vmem>>, %arg3: memref<2x8x8xf32, #tpu.memory_space<vmem>>, %arg4: memref<16x1xf32, #tpu.memory_space<vmem>>, %arg5: memref<1x16x256xf32, #tpu.memory_space<vmem>>) attributes {dimension_semantics = [#tpu.dimension_semantics<parallel>, #tpu.dimension_semantics<parallel>], iteration_bounds = array<i64: 2, 1>, scalar_prefetch = 0 : i64, scratch_operands = 0 : i64, tpu.core_type = #tpu.core_type<tc>, window_params = [{transform_indices = @transform_0, window_bounds = array<i64: 1, 16, 256>}, {pipeline_mode = #tpu.pipeline_mode<synchronous>, transform_indices = @transform_1, window_bounds = array<i64: 2, 8, 8>}, {pipeline_mode = #tpu.pipeline_mode<synchronous>, transform_indices = @transform_2, window_bounds = array<i64: 16, 1>}, {transform_indices = @transform_3, window_bounds = array<i64: 1, 16, 256>}]} {
    %c0 = arith.constant 0 : index
    %c0_0 = arith.constant 0 : index
    %c0_1 = arith.constant 0 : index
    %0 = vector.load %arg3[%c0, %c0_0, %c0_1] : memref<2x8x8xf32, #tpu.memory_space<vmem>>, vector<1x8x8xf32>
    %1 = vector.shape_cast %0 : vector<1x8x8xf32> to vector<8x8xf32>
    %c0_2 = arith.constant 0 : index
    %c0_3 = arith.constant 0 : index
    %c0_4 = arith.constant 0 : index
    %2 = vector.load %arg2[%c0_2, %c0_3, %c0_4] : memref<1x16x256xf32, #tpu.memory_space<vmem>>, vector<1x8x256xf32>
    %3 = vector.shape_cast %2 : vector<1x8x256xf32> to vector<8x256xf32>
    %cst = arith.constant dense<0.000000e+00> : vector<8x256xf32>
    %4 = tpu.matmul %1, %3, %cst {dimension_numbers = #tpu.dot_dimension_numbers<[1], [0], [0], [1], [0, 0, 1, 1], [], []>} : vector<8x8xf32>, vector<8x256xf32>, vector<8x256xf32> -> vector<8x256xf32>
    %c0_5 = arith.constant 0 : index
    %c0_6 = arith.constant 0 : index
    %5 = vector.load %arg4[%c0_5, %c0_6] : memref<16x1xf32, #tpu.memory_space<vmem>>, vector<8x1xf32>
    %6 = vector.broadcast %5 : vector<8x1xf32> to vector<8x256xf32>
    %7 = arith.addf %4, %6 : vector<8x256xf32>
    %c0_7 = arith.constant 0 : index
    %c0_8 = arith.constant 0 : index
    %c0_9 = arith.constant 0 : index
    %8 = vector.load %arg5[%c0_7, %c0_8, %c0_9] : memref<1x16x256xf32, #tpu.memory_space<vmem>>, vector<1x8x256xf32>
    %9 = vector.shape_cast %8 : vector<1x8x256xf32> to vector<8x256xf32>
    %10 = vector.shape_cast %7 : vector<8x256xf32> to vector<1x8x256xf32>
    tpu.vector_store %arg5[%c0_7, %c0_8, %c0_9], %10 {strides = array<i32>} : memref<1x16x256xf32, #tpu.memory_space<vmem>>, vector<1x8x256xf32>,
    %c1 = arith.constant 1 : index
    %c0_10 = arith.constant 0 : index
    %c0_11 = arith.constant 0 : index
    %11 = vector.load %arg3[%c1, %c0_10, %c0_11] : memref<2x8x8xf32, #tpu.memory_space<vmem>>, vector<1x8x8xf32>
    %12 = vector.shape_cast %11 : vector<1x8x8xf32> to vector<8x8xf32>
    %c0_12 = arith.constant 0 : index
    %c8 = arith.constant 8 : index
    %c0_13 = arith.constant 0 : index
    %13 = vector.load %arg2[%c0_12, %c8, %c0_13] : memref<1x16x256xf32, #tpu.memory_space<vmem>>, vector<1x8x256xf32>
    %14 = vector.shape_cast %13 : vector<1x8x256xf32> to vector<8x256xf32>
    %cst_14 = arith.constant dense<0.000000e+00> : vector<8x256xf32>
    %15 = tpu.matmul %12, %14, %cst_14 {dimension_numbers = #tpu.dot_dimension_numbers<[1], [0], [0], [1], [0, 0, 1, 1], [], []>} : vector<8x8xf32>, vector<8x256xf32>, vector<8x256xf32> -> vector<8x256xf32>
    %c8_15 = arith.constant 8 : index
    %c0_16 = arith.constant 0 : index
    %16 = vector.load %arg4[%c8_15, %c0_16] : memref<16x1xf32, #tpu.memory_space<vmem>>, vector<8x1xf32>
    %17 = vector.broadcast %16 : vector<8x1xf32> to vector<8x256xf32>
    %18 = arith.addf %15, %17 : vector<8x256xf32>
    %c0_17 = arith.constant 0 : index
    %c8_18 = arith.constant 8 : index
    %c0_19 = arith.constant 0 : index
    %19 = vector.load %arg5[%c0_17, %c8_18, %c0_19] : memref<1x16x256xf32, #tpu.memory_space<vmem>>, vector<1x8x256xf32>
    %20 = vector.shape_cast %19 : vector<1x8x256xf32> to vector<8x256xf32>
    %21 = vector.shape_cast %18 : vector<8x256xf32> to vector<1x8x256xf32>
    tpu.vector_store %arg5[%c0_17, %c8_18, %c0_19], %21 {strides = array<i32>} : memref<1x16x256xf32, #tpu.memory_space<vmem>>, vector<1x8x256xf32>,
    return
  }
  func.func @transform_0(%arg0: i32, %arg1: i32) -> (i32, i32, i32) {
    %c0_i32 = arith.constant 0 : i32
    %c0_i32_0 = arith.constant 0 : i32
    return %arg0, %c0_i32, %arg1 : i32, i32, i32
  }
  func.func @transform_1(%arg0: i32, %arg1: i32) -> (i32, i32, i32) {
    %c0_i32 = arith.constant 0 : i32
    %c0_i32_0 = arith.constant 0 : i32
    %c0_i32_1 = arith.constant 0 : i32
    %c0_i32_2 = arith.constant 0 : i32
    return %c0_i32, %c0_i32_0, %c0_i32_1 : i32, i32, i32
  }
  func.func @transform_2(%arg0: i32, %arg1: i32) -> (i32, i32) {
    %c0_i32 = arith.constant 0 : i32
    %c0_i32_0 = arith.constant 0 : i32
    %c0_i32_1 = arith.constant 0 : i32
    return %c0_i32, %c0_i32_0 : i32, i32
  }
  func.func @transform_3(%arg0: i32, %arg1: i32) -> (i32, i32, i32) {
    %c0_i32 = arith.constant 0 : i32
    %c0_i32_0 = arith.constant 0 : i32
    return %arg0, %c0_i32, %arg1 : i32, i32, i32
  }
}

</mosaic_0001>

<llo_original>
// kernel: mul.6
$region0: #{mul.6}
  %s0 = inlined_call_operand.vmem [shape: f32[16], index: 0, kind: input, shape index: {}]
  %s1 = inlined_call_operand.vmem [shape: f32[2,8], index: 1, kind: output, shape index: {}]
  $region1: #{mul.6} parent=0
    #allocation0 [shape = 'u8[4096]{0}', space=vmem, size = 0x1000, scoped, tag = 'scoped mem for output reshape']
    #allocation1 [shape = 'u8[4096]{0}', space=vmem, size = 0x1000, scoped, tag = 'scoped mem for input reshape']
    %s3 = sshllo.u32 0, 1
    %v4 = vld [vmem:[%s0] sm:%s3]
    %5 = vst [vmem:[#allocation1] sm:%s3] %v4
    %v6 = vld [vmem:[#allocation1] sm:$0x1]
    %vm7 = vcmask 64512
    %8 = vst.msk [vmem:[#allocation0] sm:$0x1] %vm7, %v6
    %v9 = vld [vmem:[#allocation1] sm:$0x1]
    %10 = vrot.lane.b32.xlu0 %v9, 120
    %v11 = vpop.permute.xlu0 %10
    %vm12 = vcmask 64512
    %s13 = scalar_lea.vmem [#allocation0], 1
    %14 = vst.msk [vmem:[%s13] sm:$0x1] %vm12, %v11
    %s16 = sshllo.u32 0, 2
    %v18 = vld [vmem:[#allocation0] sm:%s16]
    %s19 = sshllo.u32 0, 2
    %20 = vst [vmem:[%s1] sm:%s19] %v18

// kernel: sub.1
$region0: #{sub.1}
  #allocation0 [shape = 's32[1]{0}', space=sflag, size = 0x4, scoped, tag = 'scoped memory for sub.1']
  %s0 = inlined_call_operand.vmem [shape: f32[16,1], index: 0, kind: input, shape index: {}]
  %s1 = inlined_call_operand.vmem [shape: f32[16,1], index: 1, kind: input, shape index: {}]
  %s2 = inlined_call_operand.vmem [shape: f32[16,1], index: 2, kind: output, shape index: {}]
  %v3 = vld [vmem:[%s0] sm:$0xff]
  %v4 = vld [vmem:[%s1] sm:$0xff]
  %5 = xla_tuple %v3, %v4
  %6 = xla_tuple %5
  %v7 = vsub.f32 %v3, %v4
  %8 = xla_tuple %v7
  %9 = vst [vmem:[%s2] sm:$0xff] %v7
  %s10 = scalar_lea.vmem %s0, 8
  %v11 = vld [vmem:[%s10] sm:$0xff]
  %s12 = scalar_lea.vmem %s1, 8
  %v13 = vld [vmem:[%s12] sm:$0xff]
  %14 = xla_tuple %v11, %v13
  %15 = xla_tuple %14
  %v16 = vsub.f32 %v11, %v13
  %17 = xla_tuple %v16
  %s18 = scalar_lea.vmem %s2, 8
  %19 = vst [vmem:[%s18] sm:$0xff] %v16

// kernel: mul.9
$region0: #{mul.9}
  #allocation0 [shape = 's32[1]{0}', space=sflag, size = 0x4, scoped, tag = 'scoped memory for mul.9']
  %s0 = inlined_call_operand.vmem [shape: f32[16,1], index: 0, kind: input, shape index: {}]
  %s1 = inlined_call_operand.vmem [shape: f32[16,1], index: 1, kind: input, shape index: {}]
  %s2 = inlined_call_operand.vmem [shape: f32[16,1], index: 2, kind: output, shape index: {}]
  %v3 = vld [vmem:[%s0] sm:$0x1]
  %v4 = vld [vmem:[%s1] sm:$0x1]
  %5 = xla_tuple %v3, %v4
  %6 = xla_tuple %5
  %v7 = vmul.f32 %v3, %v4
  %8 = xla_tuple %v7
  %9 = vst [vmem:[%s2] sm:$0x1] %v7

// kernel: zca_norm_eval.1
$region0: #{zca_norm_eval.1}
  #allocation0 [shape = 'u32[]', space=smem, size = 0x4, offset = 0x4, fixed_abs, tag = 'smem constant byte address 0x4 - core index']
  #allocation1 [shape = 'u32[144,128]{1,0:T(1,128)}', space=vmem, size = 0x12000, scoped, tag = 'internal scratch']
  %s0 = inlined_call_operand.vmem [shape: f32[2,16,256], index: 0, kind: input, shape index: {}]
  %s1 = inlined_call_operand.vmem [shape: f32[2,8,8], index: 1, kind: input, shape index: {}]
  %s2 = inlined_call_operand.vmem [shape: f32[16,1], index: 2, kind: input, shape index: {}]
  %s3 = inlined_call_operand.vmem [shape: f32[2,16,256], index: 3, kind: output, shape index: {}]
  %s4 = sld [smem:[#allocation0]]
  $region45: #{zca_norm_eval.1} parent=0
    _
  %s6 = ssub.s32 1, %s4
  %s7 = scalar_select 0, %s6, %s4
  loop: start=0, step=1, limit=4
  $region2: #{zca_norm_eval.1} parent=0 // loop_pre_header
    _
  $region3: #{zca_norm_eval.1} parent=0 // loop_header
    %s9 = sphi 0, %s13
    %p10 = scmp.ge.s32.totalorder %s9, 4
    %s16 = sphi 0, %s28
    %s17 = sphi 0, %s24
    %s18 = sphi 0, %s16
    %s19 = sphi 0, %s17
    %s20 = sphi 0, %s18
    %s21 = sphi 0, %s19
    %s33 = sphi 0, %s35
    %s36 = sphi 0, %s33
    %s37 = sphi 0, %s36
    %s53 = sphi 0, %s37
    %s57 = sphi 0, %s57
    %s59 = sphi 0, %s57
    %s60 = sphi 0, %s59
    %s74 = sphi 0, %s60
    %s78 = sphi 0, %s78
    %s80 = sphi 0, %s78
    %s81 = sphi 0, %s80
    %s95 = sphi 0, %s81
    %s103 = sphi 0, %s105
    %s106 = sphi 0, %s103
    %s107 = sphi 0, %s106
    %s123 = sphi 0, %s107
  $region4: #{zca_norm_eval.1} parent=0 // loop_header_branch
    %12 = sbr.rel (%p10) target = $region8
  $region5: #{zca_norm_eval.1} parent=0 // loop_body
    %s14 = ssub.s32 %s9, 1
    %s15 = ssub.s32 %s9, 2
    %s22 = sadd.s32 1, %s17
    %p23 = scmp.ge.s32.totalorder %s22, 1
    %s24 = scalar_select %p23, 0, %s22
    %s25 = sadd.s32 1, %s16
    %s26 = scalar_select %p23, %s25, %s16
    %p27 = scmp.ge.s32.totalorder %s26, 2
    %s28 = scalar_select %p27, 0, %s26
    %s29 = ssub.s32 %s16, %s28
    %s30 = ssub.s32 %s17, %s24
    %s31 = sor.u32 %s29, %s30
    %p32 = scmp.eq.s32.totalorder %s31, 0
    %s34 = sadd.s32 %s33, 1
    %s35 = scalar_select %p32, %s33, %s34
    %p38 = pneg %p32
    %p39 = scmp.eq.s32.totalorder %s9, 1
    %p40 = por %p38, %p39
    %p41 = scmp.ne.s32.totalorder %s33, %s36
    %p42 = scmp.eq.s32.totalorder %s9, 0
    %p43 = por %p41, %p42
    %p44 = scmp.ne.s32.totalorder %s33, %s36
    %p45 = scmp.eq.s32.totalorder %s14, 1
    %p46 = por %p44, %p45
    %p47 = scmp.ne.s32.totalorder %s36, %s37
    %p48 = scmp.eq.s32.totalorder %s14, 0
    %p49 = por %p47, %p48
    %p50 = scmp.ne.s32.totalorder %s36, %s37
    %p51 = scmp.eq.s32.totalorder %s15, 1
    %p52 = por %p50, %p51
    %p54 = scmp.ne.s32.totalorder %s37, %s53
    %p55 = scmp.eq.s32.totalorder %s15, 0
    %p56 = por %p54, %p55
    %s58 = sadd.s32 %s57, 1
    %p61 = scmp.eq.s32.totalorder %s9, 1
    %p62 = scmp.ne.s32.totalorder %s57, %s59
    %p63 = scmp.eq.s32.totalorder %s9, 0
    %p64 = por %p62, %p63
    %p65 = scmp.ne.s32.totalorder %s57, %s59
    %p66 = scmp.eq.s32.totalorder %s14, 1
    %p67 = por %p65, %p66
    %p68 = scmp.ne.s32.totalorder %s59, %s60
    %p69 = scmp.eq.s32.totalorder %s14, 0
    %p70 = por %p68, %p69
    %p71 = scmp.ne.s32.totalorder %s59, %s60
    %p72 = scmp.eq.s32.totalorder %s15, 1
    %p73 = por %p71, %p72
    %p75 = scmp.ne.s32.totalorder %s60, %s74
    %p76 = scmp.eq.s32.totalorder %s15, 0
    %p77 = por %p75, %p76
    %s79 = sadd.s32 %s78, 1
    %p82 = scmp.eq.s32.totalorder %s9, 1
    %p83 = scmp.ne.s32.totalorder %s78, %s80
    %p84 = scmp.eq.s32.totalorder %s9, 0
    %p85 = por %p83, %p84
    %p86 = scmp.ne.s32.totalorder %s78, %s80
    %p87 = scmp.eq.s32.totalorder %s14, 1
    %p88 = por %p86, %p87
    %p89 = scmp.ne.s32.totalorder %s80, %s81
    %p90 = scmp.eq.s32.totalorder %s14, 0
    %p91 = por %p89, %p90
    %p92 = scmp.ne.s32.totalorder %s80, %s81
    %p93 = scmp.eq.s32.totalorder %s15, 1
    %p94 = por %p92, %p93
    %p96 = scmp.ne.s32.totalorder %s81, %s95
    %p97 = scmp.eq.s32.totalorder %s15, 0
    %p98 = por %p96, %p97
    %s99 = ssub.s32 %s16, %s28
    %s100 = ssub.s32 %s17, %s24
    %s101 = sor.u32 %s99, %s100
    %p102 = scmp.eq.s32.totalorder %s101, 0
    %s104 = sadd.s32 %s103, 1
    %s105 = scalar_select %p102, %s103, %s104
    %p108 = pneg %p102
    %p109 = scmp.eq.s32.totalorder %s9, 1
    %p110 = por %p108, %p109
    %p111 = scmp.ne.s32.totalorder %s103, %s106
    %p112 = scmp.eq.s32.totalorder %s9, 0
    %p113 = por %p111, %p112
    %p114 = scmp.ne.s32.totalorder %s103, %s106
    %p115 = scmp.eq.s32.totalorder %s14, 1
    %p116 = por %p114, %p115
    %p117 = scmp.ne.s32.totalorder %s106, %s107
    %p118 = scmp.eq.s32.totalorder %s14, 0
    %p119 = por %p117, %p118
    %p120 = scmp.ne.s32.totalorder %s106, %s107
    %p121 = scmp.eq.s32.totalorder %s15, 1
    %p122 = por %p120, %p121
    %p124 = scmp.ne.s32.totalorder %s107, %s123
    %p125 = scmp.eq.s32.totalorder %s15, 0
    %p126 = por %p124, %p125
    %p127 = scmp.le.s32.totalorder 1, %s9
    %p128 = scmp.lt.s32.totalorder %s9, 3
    %p129 = pnand %p127, %p128
    %p130 = pneg %p129
    // Predicated region
    $region9: #{zca_norm_eval.1} parent=5 // pred_check
      _
    $region10: #{zca_norm_eval.1} parent=5 // pred_check_branch
      %132 = sbr.rel (%p129) target = $region12
    $region11: #{zca_norm_eval.1} parent=5 // pred_region
      %s133 = ssub.s32 %s9, 1
      // Predicated region
      $region13: #{zca_norm_eval.1} parent=11 // pred_check
        %p134 = pneg %p70
      $region14: #{zca_norm_eval.1} parent=11 // pred_check_branch
        %136 = sbr.rel (%p134) target = $region16
      $region15: #{zca_norm_eval.1} parent=11 // pred_region
        _
      $region16: #{zca_norm_eval.1} parent=11 // pred_fallthru
        _
      // Predicated region
      $region17: #{zca_norm_eval.1} parent=11 // pred_check
        %p137 = pneg %p91
      $region18: #{zca_norm_eval.1} parent=11 // pred_check_branch
        %139 = sbr.rel (%p137) target = $region20
      $region19: #{zca_norm_eval.1} parent=11 // pred_region
        _
      $region20: #{zca_norm_eval.1} parent=11 // pred_fallthru
        _
    $region12: #{zca_norm_eval.1} parent=5 // pred_fallthru
      _
    %p140 = scmp.lt.s32.totalorder %s9, 2
    // Predicated region
    $region21: #{zca_norm_eval.1} parent=5 // pred_check
      %p141 = pneg %p140
    $region22: #{zca_norm_eval.1} parent=5 // pred_check_branch
      %143 = sbr.rel (%p141) target = $region24
    $region23: #{zca_norm_eval.1} parent=5 // pred_region
      // Predicated region
      $region25: #{zca_norm_eval.1} parent=23 // pred_check
        %p144 = pneg %p43
      $region26: #{zca_norm_eval.1} parent=23 // pred_check_branch
        %146 = sbr.rel (%p144) target = $region28
      $region27: #{zca_norm_eval.1} parent=23 // pred_region
        %s147 = smul.u32 2, %s17
        %p148 = scmp.lt.s32.totalorder %s16, 1
        %s149 = scalar_select %p148, %s16, 1
        %p150 = scmp.lt.s32.totalorder %s147, 1
        %s151 = scalar_select %p150, %s147, 1
        %s152 = smul.addr %s149, 4
        %s153 = sadd.s32 %s151, %s152
        %s154 = smul.addr %s153, 8
        %s155 = scalar_lea.vmem %s0, %s154
        %s156 = smul.u32 2, %s17
      $region28: #{zca_norm_eval.1} parent=23 // pred_fallthru
        _
    $region24: #{zca_norm_eval.1} parent=5 // pred_fallthru
      _
    %p157 = scmp.le.s32.totalorder 1, %s9
    %p158 = scmp.lt.s32.totalorder %s9, 3
    %p159 = pnand %p157, %p158
    %p160 = pneg %p159
    // Predicated region
    $region29: #{zca_norm_eval.1} parent=5 // pred_check
      _
    $region30: #{zca_norm_eval.1} parent=5 // pred_check_branch
      %162 = sbr.rel (%p159) target = $region32
    $region31: #{zca_norm_eval.1} parent=5 // pred_region
      %s163 = ssub.s32 %s9, 1
      %s164 = smul.u32 2, %s19
      %p165 = scmp.lt.s32.totalorder %s18, 1
      %s166 = scalar_select %p165, %s18, 1
      %p167 = scmp.lt.s32.totalorder %s164, 1
      %s168 = scalar_select %p167, %s164, 1
      %s169 = smul.addr %s166, 4
      %s170 = sadd.s32 %s168, %s169
      %s171 = smul.addr %s170, 8
      %s172 = scalar_lea.vmem %s0, %s171
      %p173 = pneg %p49
      %p174 = pneg %p46
      %p175 = pneg %p70
      %p176 = pneg %p67
      %p177 = pneg %p91
      %p178 = pneg %p88
      %p179 = pneg %p119
      %p180 = pneg %p116
      %s181 = smul.u32 2, %s19
      %p182 = scmp.lt.s32.totalorder %s18, 1
      %s183 = scalar_select %p182, %s18, 1
      %p184 = scmp.lt.s32.totalorder %s181, 1
      %s185 = scalar_select %p184, %s181, 1
      %s186 = smul.addr %s183, 4
      %s187 = sadd.s32 %s185, %s186
      %s188 = smul.addr %s187, 8
      %s189 = scalar_lea.vmem %s3, %s188
      %s190 = smul.u32 2, %s19
      %p191 = scmp.lt.s32.totalorder %s18, 1
      %s192 = scalar_select %p191, %s18, 1
      %p193 = scmp.lt.s32.totalorder %s190, 1
      %s194 = scalar_select %p193, %s190, 1
      %s195 = smul.addr %s192, 4
      %s196 = sadd.s32 %s194, %s195
      %s197 = smul.addr %s196, 8
      %s198 = scalar_lea.vmem %s0, %s197
      %s199 = smul.u32 2, %s19
      %s200 = smul.u32 2, %s19
      %p201 = scmp.lt.s32.totalorder %s18, 1
      %s202 = scalar_select %p201, %s18, 1
      %p203 = scmp.lt.s32.totalorder %s200, 1
      %s204 = scalar_select %p203, %s200, 1
      %s205 = smul.addr %s202, 4
      %s206 = sadd.s32 %s204, %s205
      %s207 = smul.addr %s206, 8
      %s208 = scalar_lea.vmem %s3, %s207
      %s209 = smul.u32 2, %s19
      %v210 = vld [vmem:[%s1] sm:$0xff]
      %v211 = vld [vmem:[%s198] sm:$0xff]
      %v212 = vld [vmem:[%s198 + $0x8] sm:$0xff]
      %v213 = vld [vmem:[%s2] sm:$0xff]
      %215 = vset.pattern.permute.xlu0 0
      %216 = vperm.xlu0 %215, %v213
      %v217 = vpop.permute.xlu0 %216
      %vm219 = vcmask 64512
      %v221 = vsel %vm219, %v210, 0
      %223 = vmatprep.subr.mxu0 %v212
      %224 = vmatpush1.msra.mxu0 %v211
      %225 = vmatprep.subr.mxu0 0.0
      %226 = vmatpush1.msra.mxu0 0.0
      %227 = vmatprep.subr.mxu0 0.0
      %228 = vmatpush1.msra.mxu0 0.0
      %229 = vmatprep.subr.mxu0 0.0
      %230 = vmatpush1.msra.mxu0 0.0
      %231 = vmatprep.subr.mxu0 0.0
      %232 = vmatpush1.msra.mxu0 0.0
      %233 = vmatprep.subr.mxu0 0.0
      %234 = vmatpush1.msra.mxu0 0.0
      %235 = vmatprep.subr.mxu0 0.0
      %236 = vmatpush1.msra.mxu0 0.0
      %237 = vmatprep.subr.mxu0 0.0
      %238 = vmatpush1.msra.mxu0 0.0
      %239 = vmatprep.subr.mxu0 0.0
      %240 = vmatpush1.msra.mxu0 0.0
      %241 = vmatprep.subr.mxu0 0.0
      %242 = vmatpush1.msra.mxu0 0.0
      %243 = vmatprep.subr.mxu0 0.0
      %244 = vmatpush1.msra.mxu0 0.0
      %245 = vmatprep.subr.mxu0 0.0
      %246 = vmatpush1.msra.mxu0 0.0
      %247 = vmatprep.subr.mxu0 0.0
      %248 = vmatpush1.msra.mxu0 0.0
      %249 = vmatprep.subr.mxu0 0.0
      %250 = vmatpush1.msra.mxu0 0.0
      %251 = vmatprep.subr.mxu0 0.0
      %252 = vmatpush1.msra.mxu0 0.0
      %253 = vmatprep.subr.mxu0 0.0
      %254 = vmatpush1.msra.mxu0 0.0
      %255 = vmatprep.subr.mxu0 0.0
      %256 = vmatpush1.msra.mxu0 0.0
      %257 = vmatprep.subr.mxu0 0.0
      %258 = vmatpush1.msra.mxu0 0.0
      %259 = vmatprep.subr.mxu0 0.0
      %260 = vmatpush1.msra.mxu0 0.0
      %261 = vmatprep.subr.mxu0 0.0
      %262 = vmatpush1.msra.mxu0 0.0
      %263 = vmatprep.subr.mxu0 0.0
      %264 = vmatpush1.msra.mxu0 0.0
      %265 = vmatprep.subr.mxu0 0.0
      %266 = vmatpush1.msra.mxu0 0.0
      %267 = vmatprep.subr.mxu0 0.0
      %268 = vmatpush1.msra.mxu0 0.0
      %269 = vmatprep.subr.mxu0 0.0
      %270 = vmatpush1.msra.mxu0 0.0
      %271 = vmatprep.subr.mxu0 0.0
      %272 = vmatpush1.msra.mxu0 0.0
      %273 = vmatprep.subr.mxu0 0.0
      %274 = vmatpush1.msra.mxu0 0.0
      %275 = vmatprep.subr.mxu0 0.0
      %276 = vmatpush1.msra.mxu0 0.0
      %277 = vmatprep.subr.mxu0 0.0
      %278 = vmatpush1.msra.mxu0 0.0
      %279 = vmatprep.subr.mxu0 0.0
      %280 = vmatpush1.msra.mxu0 0.0
      %281 = vmatprep.subr.mxu0 0.0
      %282 = vmatpush1.msra.mxu0 0.0
      %283 = vmatprep.subr.mxu0 0.0
      %284 = vmatpush1.msra.mxu0 0.0
      %285 = vmatprep.subr.mxu0 0.0
      %286 = vmatpush1.msra.mxu0 0.0
      %287 = vmatprep.mubr.f32.mxu0 0.0
      %288 = vmatmul.mubr.f32.gmra.mrb[0].mxu0 %v221
      %v289 = vpop.f32.mrb[0].mxu0
      %v290 = vadd.f32 %v217, %v289
      %v291 = vpop.f32.mrb[0].mxu0
      %v292 = vadd.f32 %v217, %v291
      %293 = vdwg.mxu0
      %294 = vst [vmem:[%s208] sm:$0xff] %v290
      %295 = vst [vmem:[%s208 + $0x8] sm:$0xff] %v292
      %s296 = scalar_lea.vmem %s1, 8
      %v297 = vld [vmem:[%s296] sm:$0xff]
      %v298 = vld [vmem:[%s198 + $0x10] sm:$0xff]
      %v299 = vld [vmem:[%s198 + $0x18] sm:$0xff]
      %v300 = vld [vmem:[%s2 + $0x8] sm:$0xff]
      %302 = vset.pattern.permute.xlu0 0
      %303 = vperm.xlu0 %302, %v300
      %v304 = vpop.permute.xlu0 %303
      %v307 = vsel %vm219, %v297, 0
      %309 = vmatprep.subr.mxu0 %v299
      %310 = vmatpush1.msra.mxu0 %v298
      %311 = vmatprep.subr.mxu0 0.0
      %312 = vmatpush1.msra.mxu0 0.0
      %313 = vmatprep.subr.mxu0 0.0
      %314 = vmatpush1.msra.mxu0 0.0
      %315 = vmatprep.subr.mxu0 0.0
      %316 = vmatpush1.msra.mxu0 0.0
      %317 = vmatprep.subr.mxu0 0.0
      %318 = vmatpush1.msra.mxu0 0.0
      %319 = vmatprep.subr.mxu0 0.0
      %320 = vmatpush1.msra.mxu0 0.0
      %321 = vmatprep.subr.mxu0 0.0
      %322 = vmatpush1.msra.mxu0 0.0
      %323 = vmatprep.subr.mxu0 0.0
      %324 = vmatpush1.msra.mxu0 0.0
      %325 = vmatprep.subr.mxu0 0.0
      %326 = vmatpush1.msra.mxu0 0.0
      %327 = vmatprep.subr.mxu0 0.0
      %328 = vmatpush1.msra.mxu0 0.0
      %329 = vmatprep.subr.mxu0 0.0
      %330 = vmatpush1.msra.mxu0 0.0
      %331 = vmatprep.subr.mxu0 0.0
      %332 = vmatpush1.msra.mxu0 0.0
      %333 = vmatprep.subr.mxu0 0.0
      %334 = vmatpush1.msra.mxu0 0.0
      %335 = vmatprep.subr.mxu0 0.0
      %336 = vmatpush1.msra.mxu0 0.0
      %337 = vmatprep.subr.mxu0 0.0
      %338 = vmatpush1.msra.mxu0 0.0
      %339 = vmatprep.subr.mxu0 0.0
      %340 = vmatpush1.msra.mxu0 0.0
      %341 = vmatprep.subr.mxu0 0.0
      %342 = vmatpush1.msra.mxu0 0.0
      %343 = vmatprep.subr.mxu0 0.0
      %344 = vmatpush1.msra.mxu0 0.0
      %345 = vmatprep.subr.mxu0 0.0
      %346 = vmatpush1.msra.mxu0 0.0
      %347 = vmatprep.subr.mxu0 0.0
      %348 = vmatpush1.msra.mxu0 0.0
      %349 = vmatprep.subr.mxu0 0.0
      %350 = vmatpush1.msra.mxu0 0.0
      %351 = vmatprep.subr.mxu0 0.0
      %352 = vmatpush1.msra.mxu0 0.0
      %353 = vmatprep.subr.mxu0 0.0
      %354 = vmatpush1.msra.mxu0 0.0
      %355 = vmatprep.subr.mxu0 0.0
      %356 = vmatpush1.msra.mxu0 0.0
      %357 = vmatprep.subr.mxu0 0.0
      %358 = vmatpush1.msra.mxu0 0.0
      %359 = vmatprep.subr.mxu0 0.0
      %360 = vmatpush1.msra.mxu0 0.0
      %361 = vmatprep.subr.mxu0 0.0
      %362 = vmatpush1.msra.mxu0 0.0
      %363 = vmatprep.subr.mxu0 0.0
      %364 = vmatpush1.msra.mxu0 0.0
      %365 = vmatprep.subr.mxu0 0.0
      %366 = vmatpush1.msra.mxu0 0.0
      %367 = vmatprep.subr.mxu0 0.0
      %368 = vmatpush1.msra.mxu0 0.0
      %369 = vmatprep.subr.mxu0 0.0
      %370 = vmatpush1.msra.mxu0 0.0
      %371 = vmatprep.subr.mxu0 0.0
      %372 = vmatpush1.msra.mxu0 0.0
      %373 = vmatprep.mubr.f32.mxu0 0.0
      %374 = vmatmul.mubr.f32.gmra.mrb[0].mxu0 %v307
      %v375 = vpop.f32.mrb[0].mxu0
      %v376 = vadd.f32 %v304, %v375
      %v377 = vpop.f32.mrb[0].mxu0
      %v378 = vadd.f32 %v304, %v377
      %379 = vdwg.mxu0
      %380 = vst [vmem:[%s208 + $0x10] sm:$0xff] %v376
      %381 = vst [vmem:[%s208 + $0x18] sm:$0xff] %v378
      %s382 = smul.u32 2, %s19
      %p383 = scmp.lt.s32.totalorder %s18, 1
      %s384 = scalar_select %p383, %s18, 1
      %p385 = scmp.lt.s32.totalorder %s382, 1
      %s386 = scalar_select %p385, %s382, 1
      %s387 = smul.addr %s384, 4
      %s388 = sadd.s32 %s386, %s387
      %s389 = smul.addr %s388, 8
      %s390 = scalar_lea.vmem %s3, %s389
      // Predicated region
      $region33: #{zca_norm_eval.1} parent=31 // pred_check
        %p391 = pneg %p116
      $region34: #{zca_norm_eval.1} parent=31 // pred_check_branch
        %393 = sbr.rel (%p391) target = $region36
      $region35: #{zca_norm_eval.1} parent=31 // pred_region
        %s394 = smul.u32 2, %s19
      $region36: #{zca_norm_eval.1} parent=31 // pred_fallthru
        _
    $region32: #{zca_norm_eval.1} parent=5 // pred_fallthru
      _
    %p395 = scmp.le.s32.totalorder 2, %s9
    // Predicated region
    $region37: #{zca_norm_eval.1} parent=5 // pred_check
      %p396 = pneg %p395
    $region38: #{zca_norm_eval.1} parent=5 // pred_check_branch
      %398 = sbr.rel (%p396) target = $region40
    $region39: #{zca_norm_eval.1} parent=5 // pred_region
      %s399 = ssub.s32 %s9, 2
      // Predicated region
      $region41: #{zca_norm_eval.1} parent=39 // pred_check
        %p400 = pneg %p122
      $region42: #{zca_norm_eval.1} parent=39 // pred_check_branch
        %402 = sbr.rel (%p400) target = $region44
      $region43: #{zca_norm_eval.1} parent=39 // pred_region
        %s403 = smul.u32 2, %s21
        %p404 = scmp.lt.s32.totalorder %s20, 1
        %s405 = scalar_select %p404, %s20, 1
        %p406 = scmp.lt.s32.totalorder %s403, 1
        %s407 = scalar_select %p406, %s403, 1
        %s408 = smul.addr %s405, 4
        %s409 = sadd.s32 %s407, %s408
        %s410 = smul.addr %s409, 8
        %s411 = scalar_lea.vmem %s3, %s410
      $region44: #{zca_norm_eval.1} parent=39 // pred_fallthru
        _
    $region40: #{zca_norm_eval.1} parent=5 // pred_fallthru
      _
  $region6: #{zca_norm_eval.1} parent=0 // loop_footer
    %s13 = sadd.s32 1, %s9
  $region7: #{zca_norm_eval.1} parent=0 // loop_footer_branch
    %8 = sbr.rel target = $region3
  $region8: #{zca_norm_eval.1} parent=0 // loop_exit
    _

</llo_original>
